<compile_context>
chip_gen: v7x
topology: tpu7x:2x2x1
jax: 0.10.0
libtpu: 0.0.40
codegen_flags: <defaults>
</compile_context>

<pallas_src>
import jax
import jax.numpy as jnp
from jax import lax
from jax.experimental import pallas as pl
from jax.experimental.pallas import tpu as pltpu


def _round_up(x, m):
    return ((x + m - 1) // m) * m


def _logsigmoid(x):
    # Numerically stable log(sigmoid(x)) = min(x, 0) - log1p(exp(-|x|))
    return jnp.minimum(x, 0.0) - jnp.log1p(jnp.exp(-jnp.abs(x)))


def line_loss_kernel(meta_ref, app_idx_ref, ent_idx_ref,
                     app_tbl_ref, ent_tbl_ref, out_ref):
    """One batch tile of the LINE negative-sampling loss.

    meta_ref:    (2,)  SMEM int32: [num_positive_rows, num_real_rows]
    app_idx_ref: (TB, 1) int32 app indices for this tile (pos then neg, 0-pad)
    ent_idx_ref: (TB, 1) int32 entity indices for this tile
    app_tbl_ref: (A, D) full app embedding table, VMEM-resident
    ent_tbl_ref: (E, D) full entity embedding table, VMEM-resident
    out_ref:     (8, 128) this block's partial loss, replicated lane-dense
    """
    tb = app_idx_ref.shape[0]
    n_app = app_tbl_ref.shape[0]
    n_ent = ent_tbl_ref.shape[0]

    app_idx = app_idx_ref[...]                                   # (TB, 1) i32
    ent_idx = ent_idx_ref[...]                                   # (TB, 1) i32

    # In-kernel gather via one-hot matmul on the (otherwise idle) MXU.
    # One-hot selection is exact in any table dtype; accumulate in f32.
    app_oh = (app_idx == lax.broadcasted_iota(jnp.int32, (tb, n_app), 1)
              ).astype(app_tbl_ref.dtype)                        # (TB, A)
    ent_oh = (ent_idx == lax.broadcasted_iota(jnp.int32, (tb, n_ent), 1)
              ).astype(ent_tbl_ref.dtype)                        # (TB, E)
    a = jnp.dot(app_oh, app_tbl_ref[...],
                preferred_element_type=jnp.float32)              # (TB, D) f32
    e = jnp.dot(ent_oh, ent_tbl_ref[...],
                preferred_element_type=jnp.float32)              # (TB, D) f32

    score = jnp.sum(a * e, axis=1, keepdims=True)                # (TB, 1)

    # Sign / padding mask derived from the global row id: +1 for positive
    # rows, -1 for negative rows, 0 for tail padding.
    row = pl.program_id(0) * tb + lax.broadcasted_iota(jnp.int32, (tb, 1), 0)
    n_pos = meta_ref[0]
    n_real = meta_ref[1]
    sign = jnp.where(row < n_pos, 1.0, jnp.where(row < n_real, -1.0, 0.0))

    x = sign * score                                             # +score / -score
    logsig = jnp.minimum(x, 0.0) - jnp.log1p(jnp.exp(-jnp.abs(x)))
    contrib = jnp.where(sign != 0.0, logsig, 0.0)                # mask padding

    block_loss = -jnp.sum(contrib, axis=0, keepdims=True)        # (1, 1)
    out_ref[...] = jnp.broadcast_to(block_loss, out_ref.shape)


def _pick_tile_rows(batch, n_app, n_ent, emb_dim, *, sublane=8,
                    compute_budget_bytes=8 * 1024 * 1024, max_rows=4096):
    # Per-row in-flight f32 footprint inside the kernel: two one-hot rows
    # (lane-padded vocab widths) plus gathered rows / products (lane-padded
    # emb_dim, with slack).
    per_row = 4 * (_round_up(n_app, 128) + _round_up(n_ent, 128)
                   + 4 * _round_up(emb_dim, 128))
    cap = max(sublane, ((compute_budget_bytes // per_row) // sublane) * sublane)
    cap = min(cap, max_rows)

    b_r = _round_up(max(int(batch), 1), sublane)
    # Aim for at least 2 grid steps whenever the batch allows it so that v7x
    # can shard the "parallel" axis across both TensorCores.
    target = _round_up(-(-b_r // 2), sublane) if b_r > sublane else b_r
    return max(sublane, min(cap, target))


def _vmem_limit_bytes(tb, n_app, n_ent, emb_dim, table_itemsize):
    lane, sub = 128, 8
    ru = _round_up
    tables = 2 * (ru(n_app, sub) * ru(emb_dim, lane)
                  + ru(n_ent, sub) * ru(emb_dim, lane)) * table_itemsize
    idx = 2 * 2 * tb * lane * 4            # two (TB,1) int32 inputs, 2 buffers
    out = 2 * 8 * lane * 4
    compute = tb * (ru(n_app, lane) + ru(n_ent, lane)
                    + 4 * ru(emb_dim, lane)) * 4
    est = tables + idx + out + compute
    # Generous headroom; stays well under v7x's 64 MiB/TC physical VMEM and
    # above v5e's 16 MiB scoped default when larger tiles are picked.
    return int(min(48 * 1024 * 1024, max(8 * 1024 * 1024, 2 * est)))


def line_forward(app_emb, entity_emb, pos_app, pos_entity, neg_app, neg_entity,
                 *, tile_rows=None):
    """LINE.forward: scalar loss = -(sum logsigmoid(pos) + sum logsigmoid(-neg))."""
    n_app, emb_dim = app_emb.shape
    n_ent = entity_emb.shape[0]
    bp = pos_app.shape[0]
    bn = neg_app.shape[0]
    b = bp + bn
    sublane = 8

    if tile_rows is None:
        tb = _pick_tile_rows(b, n_app, n_ent, emb_dim, sublane=sublane)
    else:
        tb = max(sublane, (int(tile_rows) // sublane) * sublane)
    g = -(-b // tb)
    b_pad = g * tb
    pad = b_pad - b

    # Only the tiny index vectors are padded / streamed; padded rows gather
    # index 0 (valid) and are masked in-kernel by the row-id sign.
    app_idx = jnp.concatenate(
        [pos_app.astype(jnp.int32), neg_app.astype(jnp.int32),
         jnp.zeros((pad,), jnp.int32)]).reshape(b_pad, 1)
    ent_idx = jnp.concatenate(
        [pos_entity.astype(jnp.int32), neg_entity.astype(jnp.int32),
         jnp.zeros((pad,), jnp.int32)]).reshape(b_pad, 1)
    meta = jnp.array([bp, b], jnp.int32)

    grid_spec = pltpu.PrefetchScalarGridSpec(
        num_scalar_prefetch=1,
        grid=(g,),
        in_specs=[
            pl.BlockSpec((tb, 1), lambda i, meta: (i, 0)),
            pl.BlockSpec((tb, 1), lambda i, meta: (i, 0)),
            # Full tables, constant block index -> DMA'd once, VMEM-resident.
            pl.BlockSpec((n_app, emb_dim), lambda i, meta: (0, 0)),
            pl.BlockSpec((n_ent, emb_dim), lambda i, meta: (0, 0)),
        ],
        out_specs=pl.BlockSpec((8, 128), lambda i, meta: (i, 0)),
    )

    partials = pl.pallas_call(
        line_loss_kernel,
        out_shape=jax.ShapeDtypeStruct((8 * g, 128), jnp.float32),
        grid_spec=grid_spec,
        compiler_params=pltpu.CompilerParams(
            dimension_semantics=("parallel",),
            vmem_limit_bytes=_vmem_limit_bytes(
                tb, n_app, n_ent, emb_dim, jnp.dtype(app_emb.dtype).itemsize),
        ),
    )(meta, app_idx, ent_idx, app_emb, entity_emb)

    # One partial per grid block (replicated across its (8, 128) block).
    return jnp.sum(partials[0::8, 0])


def _reference(app_emb, entity_emb, pos_app, pos_entity, neg_app, neg_entity):
    pa = app_emb[pos_app].astype(jnp.float32)
    pe = entity_emb[pos_entity].astype(jnp.float32)
    na = app_emb[neg_app].astype(jnp.float32)
    ne = entity_emb[neg_entity].astype(jnp.float32)
    pos = jnp.sum(pa * pe, axis=1)
    neg = jnp.sum(na * ne, axis=1)
    return -(jnp.sum(_logsigmoid(pos)) + jnp.sum(_logsigmoid(-neg)))


if __name__ == "__main__":
    key = jax.random.PRNGKey(0)
    app_count, entity_count, embedding_dim = 16, 32, 32
    batch_pos, batch_neg = 8, 12

    k1, k2, k3, k4, k5, k6 = jax.random.split(key, 6)
    # Deterministic "pretrained" embedding tables (stand-in for the json loads).
    app_emb = jax.random.normal(k1, (app_count, embedding_dim), jnp.float32) * 0.1
    entity_emb = jax.random.normal(k2, (entity_count, embedding_dim), jnp.float32) * 0.1

    pos_app = jax.random.randint(k3, (batch_pos,), 0, app_count, jnp.int32)
    pos_entity = jax.random.randint(k4, (batch_pos,), 0, entity_count, jnp.int32)
    neg_app = jax.random.randint(k5, (batch_neg,), 0, app_count, jnp.int32)
    neg_entity = jax.random.randint(k6, (batch_neg,), 0, entity_count, jnp.int32)

    fwd = jax.jit(line_forward, static_argnames=("tile_rows",))
    ref = _reference(app_emb, entity_emb, pos_app, pos_entity, neg_app, neg_entity)

    # Auto-sized tiling: 2 grid steps (megacore-friendly) with masked tail rows.
    loss = jax.block_until_ready(
        fwd(app_emb, entity_emb, pos_app, pos_entity, neg_app, neg_entity))
    assert jnp.allclose(loss, ref, rtol=1e-5, atol=1e-5), (loss, ref)

    # Forced small tile: exercises a 3-step grid, per-block partial sums and
    # tail-row masking.
    loss_tiled = jax.block_until_ready(
        fwd(app_emb, entity_emb, pos_app, pos_entity, neg_app, neg_entity,
            tile_rows=8))
    assert jnp.allclose(loss_tiled, ref, rtol=1e-5, atol=1e-5), (loss_tiled, ref)

    print("KERNEL_OK")
</pallas_src>

<mosaic_0001>
module attributes {stable_mosaic.version = 11 : i64} {
  func.func @line_loss_kernel(%arg0: i32, %arg1: memref<2xi32, #tpu.memory_space<smem>>, %arg2: memref<16x1xi32, #tpu.memory_space<vmem>>, %arg3: memref<16x1xi32, #tpu.memory_space<vmem>>, %arg4: memref<16x32xf32, #tpu.memory_space<vmem>>, %arg5: memref<32x32xf32, #tpu.memory_space<vmem>>, %arg6: memref<8x128xf32, #tpu.memory_space<vmem>>) attributes {dimension_semantics = [#tpu.dimension_semantics<parallel>], iteration_bounds = array<i64: 2>, scalar_prefetch = 1 : i64, scratch_operands = 0 : i64, tpu.core_type = #tpu.core_type<tc>, window_params = [{transform_indices = @transform_0, window_bounds = array<i64: 16, 1>}, {transform_indices = @transform_1, window_bounds = array<i64: 16, 1>}, {pipeline_mode = #tpu.pipeline_mode<synchronous>, transform_indices = @transform_2, window_bounds = array<i64: 16, 32>}, {pipeline_mode = #tpu.pipeline_mode<synchronous>, transform_indices = @transform_3, window_bounds = array<i64: 32, 32>}, {transform_indices = @transform_4, window_bounds = array<i64: 8, 128>}]} {
    %c0 = arith.constant 0 : index
    %c0_0 = arith.constant 0 : index
    %0 = vector.load %arg2[%c0, %c0_0] : memref<16x1xi32, #tpu.memory_space<vmem>>, vector<16x1xi32>
    %c0_1 = arith.constant 0 : index
    %c0_2 = arith.constant 0 : index
    %1 = vector.load %arg3[%c0_1, %c0_2] : memref<16x1xi32, #tpu.memory_space<vmem>>, vector<16x1xi32>
    %2 = tpu.iota {dimensions = array<i32: 1>} : vector<16x16xi32>
    %3 = vector.broadcast %0 : vector<16x1xi32> to vector<16x16xi32>
    %4 = arith.cmpi eq, %3, %2 : vector<16x16xi32>
    %5 = arith.extui %4 : vector<16x16xi1> to vector<16x16xi32>
    %6 = arith.sitofp %5 : vector<16x16xi32> to vector<16x16xf32>
    %7 = tpu.iota {dimensions = array<i32: 1>} : vector<16x32xi32>
    %8 = vector.broadcast %1 : vector<16x1xi32> to vector<16x32xi32>
    %9 = arith.cmpi eq, %8, %7 : vector<16x32xi32>
    %10 = arith.extui %9 : vector<16x32xi1> to vector<16x32xi32>
    %11 = arith.sitofp %10 : vector<16x32xi32> to vector<16x32xf32>
    %c0_3 = arith.constant 0 : index
    %c0_4 = arith.constant 0 : index
    %12 = vector.load %arg4[%c0_3, %c0_4] : memref<16x32xf32, #tpu.memory_space<vmem>>, vector<16x32xf32>
    %cst = arith.constant dense<0.000000e+00> : vector<16x32xf32>
    %13 = tpu.matmul %6, %12, %cst {dimension_numbers = #tpu.dot_dimension_numbers<[1], [0], [0], [1], [0, 0, 1, 1], [], []>} : vector<16x16xf32>, vector<16x32xf32>, vector<16x32xf32> -> vector<16x32xf32>
    %c0_5 = arith.constant 0 : index
    %c0_6 = arith.constant 0 : index
    %14 = vector.load %arg5[%c0_5, %c0_6] : memref<32x32xf32, #tpu.memory_space<vmem>>, vector<32x32xf32>
    %cst_7 = arith.constant dense<0.000000e+00> : vector<16x32xf32>
    %15 = tpu.matmul %11, %14, %cst_7 {dimension_numbers = #tpu.dot_dimension_numbers<[1], [0], [0], [1], [0, 0, 1, 1], [], []>} : vector<16x32xf32>, vector<32x32xf32>, vector<16x32xf32> -> vector<16x32xf32>
    %16 = arith.mulf %13, %15 : vector<16x32xf32>
    %cst_8 = arith.constant dense<0.000000e+00> : vector<16xf32>
    %17 = vector.multi_reduction <add>, %16, %cst_8 [1] : vector<16x32xf32> to vector<16xf32>
    %18 = vector.shape_cast %17 : vector<16xf32> to vector<16x1xf32>
    %c16_i32 = arith.constant 16 : i32
    %19 = arith.muli %arg0, %c16_i32 : i32
    %20 = tpu.iota {dimensions = array<i32: 0>} : vector<16x1xi32>
    %21 = vector.broadcast %19 : i32 to vector<16x1xi32>
    %22 = arith.addi %21, %20 : vector<16x1xi32>
    %c0_9 = arith.constant 0 : index
    %23 = memref.load %arg1[%c0_9] : memref<2xi32, #tpu.memory_space<smem>>
    %c1 = arith.constant 1 : index
    %24 = memref.load %arg1[%c1] : memref<2xi32, #tpu.memory_space<smem>>
    %25 = vector.broadcast %23 : i32 to vector<16x1xi32>
    %26 = arith.cmpi slt, %22, %25 : vector<16x1xi32>
    %27 = vector.broadcast %24 : i32 to vector<16x1xi32>
    %28 = arith.cmpi slt, %22, %27 : vector<16x1xi32>
    %cst_10 = arith.constant -1.000000e+00 : f32
    %cst_11 = arith.constant 0.000000e+00 : f32
    %29 = vector.broadcast %cst_10 : f32 to vector<16x1xf32>
    %30 = vector.broadcast %cst_11 : f32 to vector<16x1xf32>
    %31 = arith.select %28, %29, %30 : vector<16x1xi1>, vector<16x1xf32>
    %cst_12 = arith.constant 1.000000e+00 : f32
    %32 = vector.broadcast %cst_12 : f32 to vector<16x1xf32>
    %33 = arith.select %26, %32, %31 : vector<16x1xi1>, vector<16x1xf32>
    %34 = arith.mulf %33, %18 : vector<16x1xf32>
    %cst_13 = arith.constant 0.000000e+00 : f32
    %35 = vector.broadcast %cst_13 : f32 to vector<16x1xf32>
    %36 = arith.minimumf %34, %35 : vector<16x1xf32>
    %37 = math.absf %34 : vector<16x1xf32>
    %cst_14 = arith.constant 0.000000e+00 : f32
    %38 = vector.broadcast %cst_14 : f32 to vector<16x1xf32>
    %39 = arith.subf %38, %37 : vector<16x1xf32>
    %40 = math.exp %39 : vector<16x1xf32>
    %41 = math.log1p %40 : vector<16x1xf32>
    %42 = arith.subf %36, %41 : vector<16x1xf32>
    %cst_15 = arith.constant 0.000000e+00 : f32
    %43 = vector.broadcast %cst_15 : f32 to vector<16x1xf32>
    %44 = arith.cmpf one, %33, %43 : vector<16x1xf32>
    %cst_16 = arith.constant 0.000000e+00 : f32
    %45 = vector.broadcast %cst_16 : f32 to vector<16x1xf32>
    %46 = arith.select %44, %42, %45 : vector<16x1xi1>, vector<16x1xf32>
    %cst_17 = arith.constant dense<0.000000e+00> : vector<1xf32>
    %47 = vector.multi_reduction <add>, %46, %cst_17 [0] : vector<16x1xf32> to vector<1xf32>
    %48 = vector.shape_cast %47 : vector<1xf32> to vector<1x1xf32>
    %cst_18 = arith.constant 0.000000e+00 : f32
    %49 = vector.broadcast %cst_18 : f32 to vector<1x1xf32>
    %50 = arith.subf %49, %48 : vector<1x1xf32>
    %51 = vector.shape_cast %50 : vector<1x1xf32> to vector<1x1xf32>
    %52 = vector.broadcast %51 : vector<1x1xf32> to vector<8x128xf32>
    %c0_19 = arith.constant 0 : index
    %c0_20 = arith.constant 0 : index
    %53 = vector.load %arg6[%c0_19, %c0_20] : memref<8x128xf32, #tpu.memory_space<vmem>>, vector<8x128xf32>
    tpu.vector_store %arg6[%c0_19, %c0_20], %52 {strides = array<i32>} : memref<8x128xf32, #tpu.memory_space<vmem>>, vector<8x128xf32>,
    return
  }
  func.func @transform_0(%arg0: i32, %arg1: memref<2xi32, #tpu.memory_space<smem>>) -> (i32, i32) {
    %c0_i32 = arith.constant 0 : i32
    %c0_i32_0 = arith.constant 0 : i32
    return %arg0, %c0_i32 : i32, i32
  }
  func.func @transform_1(%arg0: i32, %arg1: memref<2xi32, #tpu.memory_space<smem>>) -> (i32, i32) {
    %c0_i32 = arith.constant 0 : i32
    %c0_i32_0 = arith.constant 0 : i32
    return %arg0, %c0_i32 : i32, i32
  }
  func.func @transform_2(%arg0: i32, %arg1: memref<2xi32, #tpu.memory_space<smem>>) -> (i32, i32) {
    %c0_i32 = arith.constant 0 : i32
    %c0_i32_0 = arith.constant 0 : i32
    %c0_i32_1 = arith.constant 0 : i32
    return %c0_i32, %c0_i32_0 : i32, i32
  }
  func.func @transform_3(%arg0: i32, %arg1: memref<2xi32, #tpu.memory_space<smem>>) -> (i32, i32) {
    %c0_i32 = arith.constant 0 : i32
    %c0_i32_0 = arith.constant 0 : i32
    %c0_i32_1 = arith.constant 0 : i32
    return %c0_i32, %c0_i32_0 : i32, i32
  }
  func.func @transform_4(%arg0: i32, %arg1: memref<2xi32, #tpu.memory_space<smem>>) -> (i32, i32) {
    %c0_i32 = arith.constant 0 : i32
    %c0_i32_0 = arith.constant 0 : i32
    return %arg0, %c0_i32 : i32, i32
  }
}

</mosaic_0001>

<llo_original>
// kernel: line_forward.1
$region0: #{line_forward.1}
  #allocation0 [shape = 'u32[]', space=smem, size = 0x4, offset = 0x4, fixed_abs, tag = 'smem constant byte address 0x4 - core index']
  #allocation1 [shape = 'u32[144,128]{1,0:T(1,128)}', space=vmem, size = 0x12000, scoped, tag = 'internal scratch']
  #allocation2 [shape = 's32[1]{0}', space=sflag, size = 0x4, scoped, tag = 'scoped memory for line_forward.1']
  #allocation3 [shape = 'u8[512]{0}', space=smem, size = 0x200, scoped, tag = 'prefetched SMEM operand 0']
  %s0 = inlined_call_operand.vmem [shape: s32[2], index: 0, kind: input, shape index: {}]
  %s1 = inlined_call_operand.vmem [shape: s32[32,1], index: 1, kind: input, shape index: {}]
  %s2 = inlined_call_operand.vmem [shape: s32[32,1], index: 2, kind: input, shape index: {}]
  %s3 = inlined_call_operand.vmem [shape: f32[16,32], index: 3, kind: input, shape index: {}]
  %s4 = inlined_call_operand.vmem [shape: f32[32,32], index: 4, kind: input, shape index: {}]
  %s5 = inlined_call_operand.vmem [shape: f32[16,128], index: 5, kind: output, shape index: {}]
  %s6 = sld [smem:[#allocation0]]
  $region49: #{line_forward.1} parent=0
    _
  %s8 = ssub.s32 1, %s6
  %s9 = scalar_select 0, %s8, %s6
  %s10 = sshll.u32 %s0, 4
  %s11 = int_to_ptr.vmem [resolvable:$true] %s10
  %13 = dma.vmem_to_smem %s11, 16, [#allocation3], [#allocation2]
  %14 = dma.done [#allocation2], 16
  %15 = sfence
  loop: start=0, step=1, limit=4
  $region2: #{line_forward.1} parent=0 // loop_pre_header
    _
  $region3: #{line_forward.1} parent=0 // loop_header
    %s17 = sphi 0, %s21
    %p18 = scmp.ge.s32.totalorder %s17, 4
    %s27 = sphi 0, %s29
    %s30 = sphi 0, %s27
    %s31 = sphi 0, %s30
    %s47 = sphi 0, %s31
    %s53 = sphi 0, %s55
    %s56 = sphi 0, %s53
    %s57 = sphi 0, %s56
    %s73 = sphi 0, %s57
    %s77 = sphi 0, %s77
    %s79 = sphi 0, %s77
    %s80 = sphi 0, %s79
    %s94 = sphi 0, %s80
    %s98 = sphi 0, %s98
    %s100 = sphi 0, %s98
    %s101 = sphi 0, %s100
    %s115 = sphi 0, %s101
    %s121 = sphi 0, %s123
    %s124 = sphi 0, %s121
    %s125 = sphi 0, %s124
    %s141 = sphi 0, %s125
  $region4: #{line_forward.1} parent=0 // loop_header_branch
    %20 = sbr.rel (%p18) target = $region8
  $region5: #{line_forward.1} parent=0 // loop_body
    %s22 = ssub.s32 %s17, 1
    %s23 = ssub.s32 %s17, 2
    %s24 = sadd.s32 %s17, 1
    %s25 = ssub.s32 %s17, %s24
    %p26 = scmp.eq.s32.totalorder %s25, 0
    %s28 = sadd.s32 %s27, 1
    %s29 = scalar_select %p26, %s27, %s28
    %p32 = pneg %p26
    %p33 = scmp.eq.s32.totalorder %s17, 1
    %p34 = por %p32, %p33
    %p35 = scmp.ne.s32.totalorder %s27, %s30
    %p36 = scmp.eq.s32.totalorder %s17, 0
    %p37 = por %p35, %p36
    %p38 = scmp.ne.s32.totalorder %s27, %s30
    %p39 = scmp.eq.s32.totalorder %s22, 1
    %p40 = por %p38, %p39
    %p41 = scmp.ne.s32.totalorder %s30, %s31
    %p42 = scmp.eq.s32.totalorder %s22, 0
    %p43 = por %p41, %p42
    %p44 = scmp.ne.s32.totalorder %s30, %s31
    %p45 = scmp.eq.s32.totalorder %s23, 1
    %p46 = por %p44, %p45
    %p48 = scmp.ne.s32.totalorder %s31, %s47
    %p49 = scmp.eq.s32.totalorder %s23, 0
    %p50 = por %p48, %p49
    %s51 = ssub.s32 %s17, %s24
    %p52 = scmp.eq.s32.totalorder %s51, 0
    %s54 = sadd.s32 %s53, 1
    %s55 = scalar_select %p52, %s53, %s54
    %p58 = pneg %p52
    %p59 = scmp.eq.s32.totalorder %s17, 1
    %p60 = por %p58, %p59
    %p61 = scmp.ne.s32.totalorder %s53, %s56
    %p62 = scmp.eq.s32.totalorder %s17, 0
    %p63 = por %p61, %p62
    %p64 = scmp.ne.s32.totalorder %s53, %s56
    %p65 = scmp.eq.s32.totalorder %s22, 1
    %p66 = por %p64, %p65
    %p67 = scmp.ne.s32.totalorder %s56, %s57
    %p68 = scmp.eq.s32.totalorder %s22, 0
    %p69 = por %p67, %p68
    %p70 = scmp.ne.s32.totalorder %s56, %s57
    %p71 = scmp.eq.s32.totalorder %s23, 1
    %p72 = por %p70, %p71
    %p74 = scmp.ne.s32.totalorder %s57, %s73
    %p75 = scmp.eq.s32.totalorder %s23, 0
    %p76 = por %p74, %p75
    %s78 = sadd.s32 %s77, 1
    %p81 = scmp.eq.s32.totalorder %s17, 1
    %p82 = scmp.ne.s32.totalorder %s77, %s79
    %p83 = scmp.eq.s32.totalorder %s17, 0
    %p84 = por %p82, %p83
    %p85 = scmp.ne.s32.totalorder %s77, %s79
    %p86 = scmp.eq.s32.totalorder %s22, 1
    %p87 = por %p85, %p86
    %p88 = scmp.ne.s32.totalorder %s79, %s80
    %p89 = scmp.eq.s32.totalorder %s22, 0
    %p90 = por %p88, %p89
    %p91 = scmp.ne.s32.totalorder %s79, %s80
    %p92 = scmp.eq.s32.totalorder %s23, 1
    %p93 = por %p91, %p92
    %p95 = scmp.ne.s32.totalorder %s80, %s94
    %p96 = scmp.eq.s32.totalorder %s23, 0
    %p97 = por %p95, %p96
    %s99 = sadd.s32 %s98, 1
    %p102 = scmp.eq.s32.totalorder %s17, 1
    %p103 = scmp.ne.s32.totalorder %s98, %s100
    %p104 = scmp.eq.s32.totalorder %s17, 0
    %p105 = por %p103, %p104
    %p106 = scmp.ne.s32.totalorder %s98, %s100
    %p107 = scmp.eq.s32.totalorder %s22, 1
    %p108 = por %p106, %p107
    %p109 = scmp.ne.s32.totalorder %s100, %s101
    %p110 = scmp.eq.s32.totalorder %s22, 0
    %p111 = por %p109, %p110
    %p112 = scmp.ne.s32.totalorder %s100, %s101
    %p113 = scmp.eq.s32.totalorder %s23, 1
    %p114 = por %p112, %p113
    %p116 = scmp.ne.s32.totalorder %s101, %s115
    %p117 = scmp.eq.s32.totalorder %s23, 0
    %p118 = por %p116, %p117
    %s119 = ssub.s32 %s17, %s24
    %p120 = scmp.eq.s32.totalorder %s119, 0
    %s122 = sadd.s32 %s121, 1
    %s123 = scalar_select %p120, %s121, %s122
    %p126 = pneg %p120
    %p127 = scmp.eq.s32.totalorder %s17, 1
    %p128 = por %p126, %p127
    %p129 = scmp.ne.s32.totalorder %s121, %s124
    %p130 = scmp.eq.s32.totalorder %s17, 0
    %p131 = por %p129, %p130
    %p132 = scmp.ne.s32.totalorder %s121, %s124
    %p133 = scmp.eq.s32.totalorder %s22, 1
    %p134 = por %p132, %p133
    %p135 = scmp.ne.s32.totalorder %s124, %s125
    %p136 = scmp.eq.s32.totalorder %s22, 0
    %p137 = por %p135, %p136
    %p138 = scmp.ne.s32.totalorder %s124, %s125
    %p139 = scmp.eq.s32.totalorder %s23, 1
    %p140 = por %p138, %p139
    %p142 = scmp.ne.s32.totalorder %s125, %s141
    %p143 = scmp.eq.s32.totalorder %s23, 0
    %p144 = por %p142, %p143
    %p145 = scmp.le.s32.totalorder 1, %s17
    %p146 = scmp.lt.s32.totalorder %s17, 3
    %p147 = pnand %p145, %p146
    %p148 = pneg %p147
    // Predicated region
    $region9: #{line_forward.1} parent=5 // pred_check
      _
    $region10: #{line_forward.1} parent=5 // pred_check_branch
      %150 = sbr.rel (%p147) target = $region12
    $region11: #{line_forward.1} parent=5 // pred_region
      %s151 = ssub.s32 %s17, 1
      // Predicated region
      $region13: #{line_forward.1} parent=11 // pred_check
        %p152 = pneg %p90
      $region14: #{line_forward.1} parent=11 // pred_check_branch
        %154 = sbr.rel (%p152) target = $region16
      $region15: #{line_forward.1} parent=11 // pred_region
        _
      $region16: #{line_forward.1} parent=11 // pred_fallthru
        _
      // Predicated region
      $region17: #{line_forward.1} parent=11 // pred_check
        %p155 = pneg %p111
      $region18: #{line_forward.1} parent=11 // pred_check_branch
        %157 = sbr.rel (%p155) target = $region20
      $region19: #{line_forward.1} parent=11 // pred_region
        _
      $region20: #{line_forward.1} parent=11 // pred_fallthru
        _
    $region12: #{line_forward.1} parent=5 // pred_fallthru
      _
    %p158 = scmp.lt.s32.totalorder %s17, 2
    // Predicated region
    $region21: #{line_forward.1} parent=5 // pred_check
      %p159 = pneg %p158
    $region22: #{line_forward.1} parent=5 // pred_check_branch
      %161 = sbr.rel (%p159) target = $region24
    $region23: #{line_forward.1} parent=5 // pred_region
      // Predicated region
      $region25: #{line_forward.1} parent=23 // pred_check
        %p162 = pneg %p37
      $region26: #{line_forward.1} parent=23 // pred_check_branch
        %164 = sbr.rel (%p162) target = $region28
      $region27: #{line_forward.1} parent=23 // pred_region
        %s165 = smul.u32 2, %s17
        %p166 = scmp.lt.s32.totalorder %s165, 3
        %s167 = scalar_select %p166, %s165, 3
        %s168 = smul.addr %s167, 8
        %s169 = scalar_lea.vmem %s1, %s168
        %s170 = smul.u32 2, %s17
      $region28: #{line_forward.1} parent=23 // pred_fallthru
        _
      // Predicated region
      $region29: #{line_forward.1} parent=23 // pred_check
        %p171 = pneg %p63
      $region30: #{line_forward.1} parent=23 // pred_check_branch
        %173 = sbr.rel (%p171) target = $region32
      $region31: #{line_forward.1} parent=23 // pred_region
        %s174 = smul.u32 2, %s17
        %p175 = scmp.lt.s32.totalorder %s174, 3
        %s176 = scalar_select %p175, %s174, 3
        %s177 = smul.addr %s176, 8
        %s178 = scalar_lea.vmem %s2, %s177
        %s179 = smul.u32 2, %s17
      $region32: #{line_forward.1} parent=23 // pred_fallthru
        _
    $region24: #{line_forward.1} parent=5 // pred_fallthru
      _
    %p180 = scmp.le.s32.totalorder 1, %s17
    %p181 = scmp.lt.s32.totalorder %s17, 3
    %p182 = pnand %p180, %p181
    %p183 = pneg %p182
    // Predicated region
    $region33: #{line_forward.1} parent=5 // pred_check
      _
    $region34: #{line_forward.1} parent=5 // pred_check_branch
      %185 = sbr.rel (%p182) target = $region36
    $region35: #{line_forward.1} parent=5 // pred_region
      %s186 = ssub.s32 %s17, 1
      %s187 = smul.u32 2, %s22
      %p188 = scmp.lt.s32.totalorder %s187, 3
      %s189 = scalar_select %p188, %s187, 3
      %s190 = smul.addr %s189, 8
      %s191 = scalar_lea.vmem %s1, %s190
      %p192 = pneg %p43
      %p193 = pneg %p40
      %s194 = smul.u32 2, %s22
      %p195 = scmp.lt.s32.totalorder %s194, 3
      %s196 = scalar_select %p195, %s194, 3
      %s197 = smul.addr %s196, 8
      %s198 = scalar_lea.vmem %s2, %s197
      %p199 = pneg %p69
      %p200 = pneg %p66
      %p201 = pneg %p90
      %p202 = pneg %p87
      %p203 = pneg %p111
      %p204 = pneg %p108
      %p205 = pneg %p137
      %p206 = pneg %p134
      %p207 = scmp.lt.s32.totalorder %s22, 1
      %s208 = scalar_select %p207, %s22, 1
      %s209 = smul.addr %s208, 8
      %s210 = scalar_lea.vmem %s5, %s209
      %s211 = smul.u32 2, %s22
      %p212 = scmp.lt.s32.totalorder %s211, 3
      %s213 = scalar_select %p212, %s211, 3
      %s214 = smul.addr %s213, 8
      %s215 = scalar_lea.vmem %s1, %s214
      %s216 = smul.u32 2, %s22
      %s217 = smul.u32 2, %s22
      %p218 = scmp.lt.s32.totalorder %s217, 3
      %s219 = scalar_select %p218, %s217, 3
      %s220 = smul.addr %s219, 8
      %s221 = scalar_lea.vmem %s2, %s220
      %s222 = smul.u32 2, %s22
      %p223 = scmp.lt.s32.totalorder %s22, 1
      %s224 = scalar_select %p223, %s22, 1
      %s225 = smul.addr %s224, 8
      %s226 = scalar_lea.vmem %s5, %s225
      %v227 = vld [vmem:[%s215] sm:$0xff]
      %v228 = vld [vmem:[%s215 + $0x8] sm:$0xff]
      %v229 = vld [vmem:[%s221] sm:$0xff]
      %v230 = vld [vmem:[%s221 + $0x8] sm:$0xff]
      %v231 = vlaneseq
      %v232 = vand.u32 %v231, 127
      %233 = vset.pattern.permute.xlu0 0
      %234 = vperm.xlu0 %233, %v227
      %v235 = vpop.permute.xlu0 %234
      %236 = vset.pattern.permute.xlu0 0
      %237 = vperm.xlu0 %236, %v228
      %v238 = vpop.permute.xlu0 %237
      %vm239 = vcmp.eq.s32.totalorder %v235, %v232
      %vm240 = vcmp.eq.s32.totalorder %v238, %v232
      %v241 = vsel %vm239, 1, 0
      %v242 = vsel %vm240, 1, 0
      %v243 = vcvt.s32.f32 %v241
      %v244 = vcvt.s32.f32 %v242
      %245 = vset.pattern.permute.xlu0 0
      %246 = vperm.xlu0 %245, %v229
      %v247 = vpop.permute.xlu0 %246
      %248 = vset.pattern.permute.xlu0 0
      %249 = vperm.xlu0 %248, %v230
      %v250 = vpop.permute.xlu0 %249
      %vm251 = vcmp.eq.s32.totalorder %v247, %v232
      %vm252 = vcmp.eq.s32.totalorder %v250, %v232
      %v253 = vsel %vm251, 1, 0
      %v254 = vsel %vm252, 1, 0
      %v255 = vcvt.s32.f32 %v253
      %v256 = vcvt.s32.f32 %v254
      %v257 = vld [vmem:[%s3] sm:$0xff]
      %v258 = vld [vmem:[%s3 + $0x8] sm:$0xff]
      %vm259 = vcmask 130048
      %v261 = vsel %vm259, %v243, 0
      %v264 = vsel %vm259, %v244, 0
      %266 = vmatprep.subr.mxu0 0.0
      %267 = vmatpush1.msra.mxu0 %v257
      %268 = vmatprep.subr.mxu0 0.0
      %269 = vmatpush1.msra.mxu0 %v258
      %270 = vmatprep.subr.mxu0 0.0
      %271 = vmatpush1.msra.mxu0 0.0
      %272 = vmatprep.subr.mxu0 0.0
      %273 = vmatpush1.msra.mxu0 0.0
      %274 = vmatprep.subr.mxu0 0.0
      %275 = vmatpush1.msra.mxu0 0.0
      %276 = vmatprep.subr.mxu0 0.0
      %277 = vmatpush1.msra.mxu0 0.0
      %278 = vmatprep.subr.mxu0 0.0
      %279 = vmatpush1.msra.mxu0 0.0
      %280 = vmatprep.subr.mxu0 0.0
      %281 = vmatpush1.msra.mxu0 0.0
      %282 = vmatprep.subr.mxu0 0.0
      %283 = vmatpush1.msra.mxu0 0.0
      %284 = vmatprep.subr.mxu0 0.0
      %285 = vmatpush1.msra.mxu0 0.0
      %286 = vmatprep.subr.mxu0 0.0
      %287 = vmatpush1.msra.mxu0 0.0
      %288 = vmatprep.subr.mxu0 0.0
      %289 = vmatpush1.msra.mxu0 0.0
      %290 = vmatprep.subr.mxu0 0.0
      %291 = vmatpush1.msra.mxu0 0.0
      %292 = vmatprep.subr.mxu0 0.0
      %293 = vmatpush1.msra.mxu0 0.0
      %294 = vmatprep.subr.mxu0 0.0
      %295 = vmatpush1.msra.mxu0 0.0
      %296 = vmatprep.subr.mxu0 0.0
      %297 = vmatpush1.msra.mxu0 0.0
      %298 = vmatprep.subr.mxu0 0.0
      %299 = vmatpush1.msra.mxu0 0.0
      %300 = vmatprep.subr.mxu0 0.0
      %301 = vmatpush1.msra.mxu0 0.0
      %302 = vmatprep.subr.mxu0 0.0
      %303 = vmatpush1.msra.mxu0 0.0
      %304 = vmatprep.subr.mxu0 0.0
      %305 = vmatpush1.msra.mxu0 0.0
      %306 = vmatprep.subr.mxu0 0.0
      %307 = vmatpush1.msra.mxu0 0.0
      %308 = vmatprep.subr.mxu0 0.0
      %309 = vmatpush1.msra.mxu0 0.0
      %310 = vmatprep.subr.mxu0 0.0
      %311 = vmatpush1.msra.mxu0 0.0
      %312 = vmatprep.subr.mxu0 0.0
      %313 = vmatpush1.msra.mxu0 0.0
      %314 = vmatprep.subr.mxu0 0.0
      %315 = vmatpush1.msra.mxu0 0.0
      %316 = vmatprep.subr.mxu0 0.0
      %317 = vmatpush1.msra.mxu0 0.0
      %318 = vmatprep.subr.mxu0 0.0
      %319 = vmatpush1.msra.mxu0 0.0
      %320 = vmatprep.subr.mxu0 0.0
      %321 = vmatpush1.msra.mxu0 0.0
      %322 = vmatprep.subr.mxu0 0.0
      %323 = vmatpush1.msra.mxu0 0.0
      %324 = vmatprep.subr.mxu0 0.0
      %325 = vmatpush1.msra.mxu0 0.0
      %326 = vmatprep.subr.mxu0 0.0
      %327 = vmatpush1.msra.mxu0 0.0
      %328 = vmatprep.subr.mxu0 0.0
      %329 = vmatpush1.msra.mxu0 0.0
      %330 = vmatprep.mubr.f32.mxu0 0.0
      %331 = vmatmul.mubr.f32.gmra.mrb[0].mxu0 %v261
      %v332 = vpop.f32.mrb[0].mxu0
      %v333 = vadd.f32 0.0, %v332
      %v334 = vpop.f32.mrb[0].mxu0
      %335 = vmatprep.mubr.f32.mxu0 0.0
      %336 = vmatmul.mubr.f32.gmra.mrb[0].mxu0 %v264
      %v337 = vpop.f32.mrb[0].mxu0
      %v338 = vadd.f32 0.0, %v337
      %v339 = vpop.f32.mrb[0].mxu0
      %340 = vdwg.mxu0
      %v341 = vld [vmem:[%s4] sm:$0xff]
      %v342 = vld [vmem:[%s4 + $0x8] sm:$0xff]
      %v343 = vld [vmem:[%s4 + $0x10] sm:$0xff]
      %v344 = vld [vmem:[%s4 + $0x18] sm:$0xff]
      %vm345 = vcmask 261120
      %v347 = vsel %vm345, %v255, 0
      %v350 = vsel %vm345, %v256, 0
      %352 = vmatprep.subr.mxu0 0.0
      %353 = vmatpush1.msra.mxu0 %v341
      %354 = vmatprep.subr.mxu0 0.0
      %355 = vmatpush1.msra.mxu0 %v342
      %356 = vmatprep.subr.mxu0 0.0
      %357 = vmatpush1.msra.mxu0 %v343
      %358 = vmatprep.subr.mxu0 0.0
      %359 = vmatpush1.msra.mxu0 %v344
      %360 = vmatprep.subr.mxu0 0.0
      %361 = vmatpush1.msra.mxu0 0.0
      %362 = vmatprep.subr.mxu0 0.0
      %363 = vmatpush1.msra.mxu0 0.0
      %364 = vmatprep.subr.mxu0 0.0
      %365 = vmatpush1.msra.mxu0 0.0
      %366 = vmatprep.subr.mxu0 0.0
      %367 = vmatpush1.msra.mxu0 0.0
      %368 = vmatprep.subr.mxu0 0.0
      %369 = vmatpush1.msra.mxu0 0.0
      %370 = vmatprep.subr.mxu0 0.0
      %371 = vmatpush1.msra.mxu0 0.0
      %372 = vmatprep.subr.mxu0 0.0
      %373 = vmatpush1.msra.mxu0 0.0
      %374 = vmatprep.subr.mxu0 0.0
      %375 = vmatpush1.msra.mxu0 0.0
      %376 = vmatprep.subr.mxu0 0.0
      %377 = vmatpush1.msra.mxu0 0.0
      %378 = vmatprep.subr.mxu0 0.0
      %379 = vmatpush1.msra.mxu0 0.0
      %380 = vmatprep.subr.mxu0 0.0
      %381 = vmatpush1.msra.mxu0 0.0
      %382 = vmatprep.subr.mxu0 0.0
      %383 = vmatpush1.msra.mxu0 0.0
      %384 = vmatprep.subr.mxu0 0.0
      %385 = vmatpush1.msra.mxu0 0.0
      %386 = vmatprep.subr.mxu0 0.0
      %387 = vmatpush1.msra.mxu0 0.0
      %388 = vmatprep.subr.mxu0 0.0
      %389 = vmatpush1.msra.mxu0 0.0
      %390 = vmatprep.subr.mxu0 0.0
      %391 = vmatpush1.msra.mxu0 0.0
      %392 = vmatprep.subr.mxu0 0.0
      %393 = vmatpush1.msra.mxu0 0.0
      %394 = vmatprep.subr.mxu0 0.0
      %395 = vmatpush1.msra.mxu0 0.0
      %396 = vmatprep.subr.mxu0 0.0
      %397 = vmatpush1.msra.mxu0 0.0
      %398 = vmatprep.subr.mxu0 0.0
      %399 = vmatpush1.msra.mxu0 0.0
      %400 = vmatprep.subr.mxu0 0.0
      %401 = vmatpush1.msra.mxu0 0.0
      %402 = vmatprep.subr.mxu0 0.0
      %403 = vmatpush1.msra.mxu0 0.0
      %404 = vmatprep.subr.mxu0 0.0
      %405 = vmatpush1.msra.mxu0 0.0
      %406 = vmatprep.subr.mxu0 0.0
      %407 = vmatpush1.msra.mxu0 0.0
      %408 = vmatprep.subr.mxu0 0.0
      %409 = vmatpush1.msra.mxu0 0.0
      %410 = vmatprep.subr.mxu0 0.0
      %411 = vmatpush1.msra.mxu0 0.0
      %412 = vmatprep.subr.mxu0 0.0
      %413 = vmatpush1.msra.mxu0 0.0
      %414 = vmatprep.subr.mxu0 0.0
      %415 = vmatpush1.msra.mxu0 0.0
      %416 = vmatprep.mubr.f32.mxu0 0.0
      %417 = vmatmul.mubr.f32.gmra.mrb[0].mxu0 %v347
      %v418 = vpop.f32.mrb[0].mxu0
      %v419 = vadd.f32 0.0, %v418
      %v420 = vpop.f32.mrb[0].mxu0
      %421 = vmatprep.mubr.f32.mxu0 0.0
      %422 = vmatmul.mubr.f32.gmra.mrb[0].mxu0 %v350
      %v423 = vpop.f32.mrb[0].mxu0
      %v424 = vadd.f32 0.0, %v423
      %v425 = vpop.f32.mrb[0].mxu0
      %426 = vdwg.mxu0
      %v427 = vmul.f32 %v333, %v419
      %v428 = vmul.f32 %v338, %v424
      %v429 = vsel %vm345, %v427, 0.0
      %430 = vadd.xlane.f32.xlu0 %v429
      %v431 = vpop.xlane.xlu0 %430
      %v432 = vsel %vm345, %v428, 0.0
      %433 = vadd.xlane.f32.xlu0 %v432
      %v434 = vpop.xlane.xlu0 %433
      %s435 = smul.u32 %s22, 16
      %v436 = vlaneseq
      %v437 = vshrl.u32 %v436, 7
      %v438 = vadd.s32 %v437, 8
      %v439 = vstv %s435
      %v440 = vadd.s32 %v439, %v437
      %v441 = vadd.s32 %v439, %v438
      %s442 = sld [smem:[#allocation3]]
      %s443 = sld [smem:[#allocation3 + $0x1]]
      %v444 = vstv %s442
      %vm445 = vcmp.lt.s32.totalorder %v440, %v444
      %vm446 = vcmp.lt.s32.totalorder %v441, %v444
      %v447 = vstv %s443
      %vm448 = vcmp.lt.s32.totalorder %v440, %v447
      %vm449 = vcmp.lt.s32.totalorder %v441, %v447
      %v450 = vsel %vm448, -1.0, 0.0
      %v451 = vsel %vm449, -1.0, 0.0
      %v452 = vsel %vm445, 1.0, %v450
      %v453 = vsel %vm446, 1.0, %v451
      %v454 = vmul.f32 %v452, %v431
      %v455 = vmul.f32 %v453, %v434
      %v456 = vmin.f32 %v454, 0.0
      %v457 = vmin.f32 %v455, 0.0
      %v458 = vand.u32 2147483647, %v454
      %v459 = vand.u32 2147483647, %v455
      %v460 = vsub.f32 0.0, %v458
      %v461 = vsub.f32 0.0, %v459
      %v462 = vmul.f32 %v460, 1.442695
      %v463 = vpow.pop %v462
      %v464 = vmul.f32 %v461, 1.442695
      %v465 = vpow.pop %v464
      %v466 = vadd.f32 %v463, 1.0
      %v467 = vlog2.pop %v466
      %v468 = vmul.f32 %v467, 0.6931472
      %v469 = vmul.f32 -0.5, %v463
      %v470 = vadd.f32 %v469, 1.0
      %v471 = vmul.f32 %v470, %v463
      %v472 = vand.u32 2147483647, %v463
      %vm473 = vcmp.lt.f32.partialorder %v472, 0.0004427343
      %v474 = vsel %vm473, %v471, %v468
      %v475 = vadd.f32 %v465, 1.0
      %v476 = vlog2.pop %v475
      %v477 = vmul.f32 %v476, 0.6931472
      %v478 = vmul.f32 -0.5, %v465
      %v479 = vadd.f32 %v478, 1.0
      %v480 = vmul.f32 %v479, %v465
      %v481 = vand.u32 2147483647, %v465
      %vm482 = vcmp.lt.f32.partialorder %v481, 0.0004427343
      %v483 = vsel %vm482, %v480, %v477
      %v484 = vsub.f32 %v456, %v474
      %v485 = vsub.f32 %v457, %v483
      %vm486 = vcmp.ne.f32.partialorder %v452, 0.0
      %vm487 = vcmp.ne.f32.partialorder %v453, 0.0
      %v488 = vsel %vm486, %v484, 0.0
      %v489 = vsel %vm487, %v485, 0.0
      %v490 = vadd.f32 %v488, %v489
      %v491 = vrot.slane %v490, 4
      %v492 = vadd.f32 %v490, %v491
      %v493 = vrot.slane %v492, 2
      %v494 = vadd.f32 %v492, %v493
      %v495 = vrot.slane %v494, 1
      %v496 = vadd.f32 %v494, %v495
      %v497 = vsub.f32 0.0, %v496
      %498 = vst [vmem:[%s226] sm:$0xff] %v497
      %p499 = scmp.lt.s32.totalorder %s22, 1
      %s500 = scalar_select %p499, %s22, 1
      %s501 = smul.addr %s500, 8
      %s502 = scalar_lea.vmem %s5, %s501
      // Predicated region
      $region37: #{line_forward.1} parent=35 // pred_check
        %p503 = pneg %p134
      $region38: #{line_forward.1} parent=35 // pred_check_branch
        %505 = sbr.rel (%p503) target = $region40
      $region39: #{line_forward.1} parent=35 // pred_region
        _
      $region40: #{line_forward.1} parent=35 // pred_fallthru
        _
    $region36: #{line_forward.1} parent=5 // pred_fallthru
      _
    %p506 = scmp.le.s32.totalorder 2, %s17
    // Predicated region
    $region41: #{line_forward.1} parent=5 // pred_check
      %p507 = pneg %p506
    $region42: #{line_forward.1} parent=5 // pred_check_branch
      %509 = sbr.rel (%p507) target = $region44
    $region43: #{line_forward.1} parent=5 // pred_region
      %s510 = ssub.s32 %s17, 2
      // Predicated region
      $region45: #{line_forward.1} parent=43 // pred_check
        %p511 = pneg %p140
      $region46: #{line_forward.1} parent=43 // pred_check_branch
        %513 = sbr.rel (%p511) target = $region48
      $region47: #{line_forward.1} parent=43 // pred_region
        %p514 = scmp.lt.s32.totalorder %s23, 1
        %s515 = scalar_select %p514, %s23, 1
        %s516 = smul.addr %s515, 8
        %s517 = scalar_lea.vmem %s5, %s516
      $region48: #{line_forward.1} parent=43 // pred_fallthru
        _
    $region44: #{line_forward.1} parent=5 // pred_fallthru
      _
  $region6: #{line_forward.1} parent=0 // loop_footer
    %s21 = sadd.s32 1, %s17
  $region7: #{line_forward.1} parent=0 // loop_footer_branch
    %16 = sbr.rel target = $region3
  $region8: #{line_forward.1} parent=0 // loop_exit
    _

</llo_original>
